<compile_context>
chip_gen: v5e
topology: v5e:2x2
jax: 0.10.0
libtpu: 0.0.40
codegen_flags: <defaults>
</compile_context>

<pallas_src>
import functools

import jax
import jax.numpy as jnp
from jax.experimental import pallas as pl
from jax.experimental.pallas import tpu as pltpu

NEG_SLOPE = 0.01   # nn.LeakyReLU default
BN_EPS = 1e-5      # nn.BatchNorm1d default
LANE = 128
SUBLANE = 16       # bf16 sublane packing (also satisfies f32's multiple-of-8)


def _round_up(a, b):
    return (a + b - 1) // b * b


def _cdiv(a, b):
    return (a + b - 1) // b


def build_gcn_adjacency(edge_index, num_nodes):
    """Dense normalized adjacency for GCNConv(aggr='mean').

    Mirrors PyG add_remaining_self_loops: pre-existing self-loops are not
    double counted (they are weight-zeroed and exactly one loop per node is
    added), followed by symmetric deg^{-1/2} normalization and division by the
    incoming message count (the 'mean' aggregation).
    edge_index: int32 [2, E], row 0 = source j, row 1 = target i (PyG layout).
    """
    src, dst = edge_index[0], edge_index[1]
    not_loop = (src != dst).astype(jnp.float32)
    loop = jnp.arange(num_nodes, dtype=edge_index.dtype)
    src_all = jnp.concatenate([src, loop])
    dst_all = jnp.concatenate([dst, loop])
    w_all = jnp.concatenate([not_loop, jnp.ones((num_nodes,), jnp.float32)])

    deg = jnp.zeros((num_nodes,), jnp.float32).at[dst_all].add(w_all)
    dis = jnp.where(deg > 0, jax.lax.rsqrt(deg), 0.0)
    norm = dis[src_all] * dis[dst_all] * w_all

    a = jnp.zeros((num_nodes, num_nodes), jnp.float32).at[dst_all, src_all].add(norm)
    cnt = jnp.zeros((num_nodes,), jnp.float32).at[dst_all].add(w_all)
    return a / jnp.maximum(cnt, 1.0)[:, None]


# --------------------------------------------------------------------------
# Kernel 1:  tiled A_hat @ R  [-> @ P]  + bias -> LeakyReLU  (+ BatchNorm)
# --------------------------------------------------------------------------
def _make_conv_kernel(*, tm, tk, n_valid, has_post, r_resident, single_pass):
    def kernel(*refs):
        it = iter(refs)
        a_ref = next(it)
        r_ref = next(it)
        p_ref = next(it) if has_post else None
        b_ref = next(it)
        if single_pass:
            g_ref = next(it)       # gamma
            be_ref = next(it)      # beta
            out_ref = next(it)     # resident (n_m_pad, F) output
            acc_ref = next(it)
            s1_ref = next(it)
            s2_ref = next(it)
        else:
            y_ref = next(it)       # pre-BN tile output
            s1_ref = next(it)      # per-m-tile sum
            s2_ref = next(it)      # per-m-tile sum of squares
            acc_ref = next(it)

        i = pl.program_id(0)
        k = pl.program_id(1)
        last_k = pl.num_programs(1) - 1
        last_i = pl.num_programs(0) - 1

        @pl.when(k == 0)
        def _():
            acc_ref[...] = jnp.zeros_like(acc_ref)

        if single_pass:
            @pl.when((i == 0) & (k == 0))
            def _():
                s1_ref[...] = jnp.zeros_like(s1_ref)
                s2_ref[...] = jnp.zeros_like(s2_ref)

        if r_resident:
            start = pl.multiple_of(k * tk, tk)
            r_blk = r_ref[pl.ds(start, tk), :]
        else:
            r_blk = r_ref[...]

        # N-contraction on the MXU: bf16 x bf16 -> f32 accumulation.
        acc_ref[...] += jnp.dot(a_ref[...], r_blk,
                                preferred_element_type=jnp.float32)

        @pl.when(k == last_k)
        def _():
            acc = acc_ref[...]
            if has_post:
                # small post-matmul, bf16 x bf16 -> f32 (single MXU pass)
                z = jnp.dot(acc.astype(jnp.bfloat16), p_ref[...],
                            preferred_element_type=jnp.float32)
            else:
                z = acc
            z = z + b_ref[...]
            y = jnp.where(z > 0, z, NEG_SLOPE * z)

            # BN partial statistics; padded (invalid) node rows masked out.
            rows = i * tm + jax.lax.broadcasted_iota(jnp.int32, (tm, 1), 0)
            ym = y * (rows < n_valid).astype(jnp.float32)
            s1 = jnp.sum(ym, axis=0, keepdims=True)         # (1, F)
            s2 = jnp.sum(ym * ym, axis=0, keepdims=True)    # (1, F)

            if single_pass:
                row0 = pl.multiple_of(i * tm, tm)
                out_ref[pl.ds(row0, tm), :] = y.astype(out_ref.dtype)
                s1_ref[...] += s1
                s2_ref[...] += s2
            else:
                y_ref[...] = y.astype(y_ref.dtype)
                s1_ref[...] = s1[None]
                s2_ref[...] = s2[None]

        if single_pass:
            @pl.when((i == last_i) & (k == last_k))
            def _():
                inv_n = 1.0 / n_valid
                mean = s1_ref[...] * inv_n
                var = jnp.maximum(s2_ref[...] * inv_n - mean * mean, 0.0)
                inv_std = jax.lax.rsqrt(var + BN_EPS)
                scale = g_ref[...] * inv_std
                shift = be_ref[...] - mean * scale
                out_ref[...] = out_ref[...] * scale + shift

    return kernel


# --------------------------------------------------------------------------
# Kernel 2 (fallback path only): apply BatchNorm  y * scale + shift
# --------------------------------------------------------------------------
def _bn_apply_kernel(y_ref, scale_ref, shift_ref, out_ref):
    out_ref[...] = (y_ref[...] * scale_ref[...] + shift_ref[...]).astype(out_ref.dtype)


def bd_layer(x, edge_index, weight, bias, gamma, beta, *,
             tile_m=512, tile_k=2048,
             single_pass_budget=24 * 1024 * 1024):
    """x: [N, F_in] f32; edge_index: [2, E] int32; weight: [F_in, F_out] f32."""
    n, f_in = x.shape
    f_out = weight.shape[1]
    hi = jax.lax.Precision.HIGHEST

    tile_m = _round_up(max(tile_m, SUBLANE), SUBLANE)
    tile_k = _round_up(max(tile_k, LANE), LANE)

    f_in_p = _round_up(f_in, LANE)
    f_out_p = _round_up(f_out, LANE)

    # ---- independent row / contraction padding (balanced, no lcm blow-up) --
    num_m = max(1, _cdiv(n, tile_m))
    tm = _round_up(_cdiv(n, num_m), SUBLANE)
    n_m_pad = tm * num_m

    n_k0 = _round_up(n, LANE)
    num_k = max(1, _cdiv(n_k0, tile_k))
    tk = _round_up(_cdiv(n_k0, num_k), LANE)
    n_k_pad = tk * num_k

    # ---- matmul reorder decided on PADDED widths ----------------------------
    has_post = f_in_p < f_out_p
    if has_post:
        f_mid_p = f_in_p
        r_src = x
        p = (jnp.zeros((f_mid_p, f_out_p), jnp.float32)
             .at[:f_in, :f_out].set(weight).astype(jnp.bfloat16))
    else:
        f_mid_p = f_out_p
        r_src = jnp.dot(x, weight, precision=hi)   # tiny pre-matmul, once
        p = None
    r = (jnp.zeros((n_k_pad, f_mid_p), jnp.float32)
         .at[:n, :r_src.shape[1]].set(r_src).astype(jnp.bfloat16))

    # ---- dense normalized adjacency, padded + bf16 ---------------------------
    a = build_gcn_adjacency(edge_index, n)
    a_pad = (jnp.zeros((n_m_pad, n_k_pad), jnp.float32)
             .at[:n, :n].set(a).astype(jnp.bfloat16))

    b_pad = jnp.zeros((1, f_out_p), jnp.float32).at[0, :f_out].set(bias)
    gamma_pad = jnp.zeros((1, f_out_p), jnp.float32).at[0, :f_out].set(gamma)
    beta_pad = jnp.zeros((1, f_out_p), jnp.float32).at[0, :f_out].set(beta)

    # ---- VMEM budgeting ------------------------------------------------------
    r_bytes = n_k_pad * f_mid_p * 2
    r_resident = r_bytes <= (8 << 20)
    base = (2 * tm * tk * 2                                       # A (dbl buf)
            + (r_bytes if r_resident else 2 * tk * f_mid_p * 2)   # R
            + (2 * f_mid_p * f_out_p * 2 if has_post else 0)      # P
            + tm * f_mid_p * 4                                    # acc scratch
            + 8 * f_out_p * 4 * 4)                                # small vectors
    est_single = base + n_m_pad * f_out_p * 4                     # resident out
    est_two = base + 2 * tm * f_out_p * 4                         # streamed Y
    single_pass = est_single <= single_pass_budget
    est = est_single if single_pass else est_two
    vmem_limit = int(min(48 << 20, max(32 << 20, 2 * est)))       # v7x-safe cap

    kern = _make_conv_kernel(tm=tm, tk=tk, n_valid=n, has_post=has_post,
                             r_resident=r_resident, single_pass=single_pass)

    in_specs = [pl.BlockSpec((tm, tk), lambda i, k: (i, k))]      # A_hat tile
    if r_resident:
        in_specs.append(pl.BlockSpec((n_k_pad, f_mid_p), lambda i, k: (0, 0)))
    else:
        in_specs.append(pl.BlockSpec((tk, f_mid_p), lambda i, k: (k, 0)))
    inputs = [a_pad, r]
    if has_post:
        in_specs.append(pl.BlockSpec((f_mid_p, f_out_p), lambda i, k: (0, 0)))
        inputs.append(p)
    in_specs.append(pl.BlockSpec((1, f_out_p), lambda i, k: (0, 0)))  # bias
    inputs.append(b_pad)

    if single_pass:
        # -------- fused conv + act + BN, output VMEM-resident ---------------
        in_specs += [pl.BlockSpec((1, f_out_p), lambda i, k: (0, 0)),
                     pl.BlockSpec((1, f_out_p), lambda i, k: (0, 0))]
        inputs += [gamma_pad, beta_pad]

        out_pad = pl.pallas_call(
            kern,
            grid=(num_m, num_k),
            in_specs=in_specs,
            out_specs=pl.BlockSpec((n_m_pad, f_out_p), lambda i, k: (0, 0)),
            out_shape=jax.ShapeDtypeStruct((n_m_pad, f_out_p), jnp.float32),
            scratch_shapes=[pltpu.VMEM((tm, f_mid_p), jnp.float32),
                            pltpu.VMEM((1, f_out_p), jnp.float32),
                            pltpu.VMEM((1, f_out_p), jnp.float32)],
            compiler_params=pltpu.CompilerParams(
                dimension_semantics=("arbitrary", "arbitrary"),
                vmem_limit_bytes=vmem_limit),
        )(*inputs)
        return out_pad[:n, :f_out]

    # -------- two-kernel fallback (activation too large for VMEM residency) --
    y_pad, s1p, s2p = pl.pallas_call(
        kern,
        grid=(num_m, num_k),
        in_specs=in_specs,
        out_specs=(pl.BlockSpec((tm, f_out_p), lambda i, k: (i, 0)),
                   pl.BlockSpec((1, 1, f_out_p), lambda i, k: (i, 0, 0)),
                   pl.BlockSpec((1, 1, f_out_p), lambda i, k: (i, 0, 0))),
        out_shape=(jax.ShapeDtypeStruct((n_m_pad, f_out_p), jnp.float32),
                   jax.ShapeDtypeStruct((num_m, 1, f_out_p), jnp.float32),
                   jax.ShapeDtypeStruct((num_m, 1, f_out_p), jnp.float32)),
        scratch_shapes=[pltpu.VMEM((tm, f_mid_p), jnp.float32)],
        compiler_params=pltpu.CompilerParams(
            dimension_semantics=("parallel", "arbitrary"),
            vmem_limit_bytes=vmem_limit),
    )(*inputs)

    # finalize BN statistics (tiny [F] math, plain-JAX glue)
    s1 = jnp.sum(s1p[:, 0, :], axis=0)
    s2 = jnp.sum(s2p[:, 0, :], axis=0)
    mean = s1 / n
    var = jnp.maximum(s2 / n - mean * mean, 0.0)     # biased (training) var
    inv_std = jax.lax.rsqrt(var + BN_EPS)
    scale = (gamma_pad[0] * inv_std).reshape(1, f_out_p)
    shift = (beta_pad[0] - mean * gamma_pad[0] * inv_std).reshape(1, f_out_p)

    # BN apply: largest row block dividing n_m_pad (<=4MiB), output aliased on Y
    g = num_m
    while g > 1 and (num_m % g != 0 or tm * g * f_out_p * 4 > (4 << 20)):
        g -= 1
    tm2 = tm * g
    num_m2 = num_m // g

    out_pad = pl.pallas_call(
        _bn_apply_kernel,
        grid=(num_m2,),
        in_specs=[pl.BlockSpec((tm2, f_out_p), lambda i: (i, 0)),
                  pl.BlockSpec((1, f_out_p), lambda i: (0, 0)),
                  pl.BlockSpec((1, f_out_p), lambda i: (0, 0))],
        out_specs=pl.BlockSpec((tm2, f_out_p), lambda i: (i, 0)),
        out_shape=jax.ShapeDtypeStruct((n_m_pad, f_out_p), jnp.float32),
        input_output_aliases={0: 0},
        compiler_params=pltpu.CompilerParams(
            dimension_semantics=("parallel",)),
    )(y_pad, scale, shift)
    return out_pad[:n, :f_out]


# --------------------------------------------------------------------------
# Pure-JAX reference (mirrors the kernel's bf16 quantization points)
# --------------------------------------------------------------------------
def _reference(x, edge_index, weight, bias, gamma, beta):
    n, f_in = x.shape
    f_out = weight.shape[1]
    hi = jax.lax.Precision.HIGHEST
    f_in_p = _round_up(f_in, LANE)
    f_out_p = _round_up(f_out, LANE)
    a_q = build_gcn_adjacency(edge_index, n).astype(jnp.bfloat16).astype(jnp.float32)
    if f_in_p < f_out_p:
        x_q = x.astype(jnp.bfloat16).astype(jnp.float32)
        ax = jnp.dot(a_q, x_q, precision=hi)
        z = jnp.dot(ax.astype(jnp.bfloat16).astype(jnp.float32),
                    weight.astype(jnp.bfloat16).astype(jnp.float32),
                    precision=hi) + bias
    else:
        h_q = jnp.dot(x, weight, precision=hi).astype(jnp.bfloat16).astype(jnp.float32)
        z = jnp.dot(a_q, h_q, precision=hi) + bias
    y = jnp.where(z > 0, z, NEG_SLOPE * z)
    m = y.mean(0, keepdims=True)
    v = ((y - m) ** 2).mean(0, keepdims=True)
    return gamma * (y - m) / jnp.sqrt(v + BN_EPS) + beta


def _run_case(key, n, f_in, f_out, e, **kw):
    k_x, k_e, k_w, k_b = jax.random.split(key, 4)
    x = jax.random.normal(k_x, (n, f_in), dtype=jnp.float32)
    edge_index = jax.random.randint(k_e, (2, e), 0, n, dtype=jnp.int32)
    weight = jax.random.normal(k_w, (f_in, f_out), dtype=jnp.float32) / jnp.sqrt(float(f_in))
    bias = 0.1 * jax.random.normal(k_b, (f_out,), dtype=jnp.float32)
    gamma = jnp.ones((f_out,), jnp.float32)    # BatchNorm1d defaults (first forward)
    beta = jnp.zeros((f_out,), jnp.float32)
    # NOTE: BatchNorm1d running-stats momentum update is a training-time buffer
    # mutation that does not affect this forward's output; it is not emitted.

    fn = jax.jit(functools.partial(bd_layer, **kw))
    out = jax.block_until_ready(fn(x, edge_index, weight, bias, gamma, beta))

    ref = _reference(x, edge_index, weight, bias, gamma, beta)
    err = float(jnp.max(jnp.abs(out - ref)))
    assert out.shape == ref.shape, (out.shape, ref.shape)
    assert jnp.allclose(out, ref, atol=3e-3, rtol=3e-3), err
    return err


if __name__ == "__main__":
    key = jax.random.PRNGKey(0)
    ks = jax.random.split(key, 6)

    # small single-tile path (F_in, F_out both pad to 128 -> post-matmul elided)
    _run_case(ks[0], n=16, f_in=8, f_out=32, e=48)
    # multi m-tile, fused single-pass BN, padded-row masking
    _run_case(ks[1], n=600, f_in=12, f_out=20, e=2400)
    # F_in_p == F_out_p -> X @ W precomputed in glue
    _run_case(ks[2], n=40, f_in=48, f_out=24, e=160)
    # F_out_p > F_in_p -> in-kernel bf16 post-matmul path
    _run_case(ks[3], n=300, f_in=96, f_out=200, e=1200)
    # multi-K accumulation + resident-R in-kernel slicing (small tiles forced)
    _run_case(ks[4], n=600, f_in=12, f_out=20, e=2400, tile_m=128, tile_k=256)
    # two-kernel fallback path (single-pass residency disabled)
    _run_case(ks[5], n=600, f_in=12, f_out=20, e=2400, single_pass_budget=0)

    print("KERNEL_OK")
</pallas_src>

<mosaic_0001>
module attributes {stable_mosaic.version = 11 : i64} {
  func.func @kernel(%arg0: i32, %arg1: i32, %arg2: memref<16x128xbf16, #tpu.memory_space<vmem>>, %arg3: memref<128x128xbf16, #tpu.memory_space<vmem>>, %arg4: memref<1x128xf32, #tpu.memory_space<vmem>>, %arg5: memref<1x128xf32, #tpu.memory_space<vmem>>, %arg6: memref<1x128xf32, #tpu.memory_space<vmem>>, %arg7: memref<16x128xf32, #tpu.memory_space<vmem>>, %arg8: memref<16x128xf32, #tpu.memory_space<vmem>>, %arg9: memref<1x128xf32, #tpu.memory_space<vmem>>, %arg10: memref<1x128xf32, #tpu.memory_space<vmem>>) attributes {dimension_semantics = [#tpu.dimension_semantics<arbitrary>, #tpu.dimension_semantics<arbitrary>], iteration_bounds = array<i64: 1, 1>, scalar_prefetch = 0 : i64, scratch_operands = 3 : i64, tpu.core_type = #tpu.core_type<tc>, window_params = [{transform_indices = @transform_0, window_bounds = array<i64: 16, 128>}, {pipeline_mode = #tpu.pipeline_mode<synchronous>, transform_indices = @transform_1, window_bounds = array<i64: 128, 128>}, {pipeline_mode = #tpu.pipeline_mode<synchronous>, transform_indices = @transform_2, window_bounds = array<i64: 1, 128>}, {pipeline_mode = #tpu.pipeline_mode<synchronous>, transform_indices = @transform_3, window_bounds = array<i64: 1, 128>}, {pipeline_mode = #tpu.pipeline_mode<synchronous>, transform_indices = @transform_4, window_bounds = array<i64: 1, 128>}, {pipeline_mode = #tpu.pipeline_mode<synchronous>, transform_indices = @transform_5, window_bounds = array<i64: 16, 128>}]} {
    %c0_i32 = arith.constant 0 : i32
    %0 = arith.cmpi eq, %arg1, %c0_i32 : i32
    %1 = arith.extui %0 : i1 to i32
    %c0_i32_0 = arith.constant 0 : i32
    %2 = arith.cmpi ne, %1, %c0_i32_0 : i32
    scf.if %2 {
      %cst_15 = arith.constant 0.000000e+00 : f32
      %25 = vector.broadcast %cst_15 : f32 to vector<16x128xf32>
      %c0_16 = arith.constant 0 : index
      %c0_17 = arith.constant 0 : index
      %26 = vector.load %arg8[%c0_16, %c0_17] : memref<16x128xf32, #tpu.memory_space<vmem>>, vector<16x128xf32>
      tpu.vector_store %arg8[%c0_16, %c0_17], %25 {strides = array<i32>} : memref<16x128xf32, #tpu.memory_space<vmem>>, vector<16x128xf32>,
    } else {
    }
    %c0_i32_1 = arith.constant 0 : i32
    %3 = arith.cmpi eq, %arg0, %c0_i32_1 : i32
    %c0_i32_2 = arith.constant 0 : i32
    %4 = arith.cmpi eq, %arg1, %c0_i32_2 : i32
    %5 = arith.andi %3, %4 : i1
    %6 = arith.extui %5 : i1 to i32
    %c0_i32_3 = arith.constant 0 : i32
    %7 = arith.cmpi ne, %6, %c0_i32_3 : i32
    scf.if %7 {
      %cst_15 = arith.constant 0.000000e+00 : f32
      %25 = vector.broadcast %cst_15 : f32 to vector<1x128xf32>
      %c0_16 = arith.constant 0 : index
      %c0_17 = arith.constant 0 : index
      %26 = vector.load %arg9[%c0_16, %c0_17] : memref<1x128xf32, #tpu.memory_space<vmem>>, vector<1x128xf32>
      tpu.vector_store %arg9[%c0_16, %c0_17], %25 {strides = array<i32>} : memref<1x128xf32, #tpu.memory_space<vmem>>, vector<1x128xf32>,
      %cst_18 = arith.constant 0.000000e+00 : f32
      %27 = vector.broadcast %cst_18 : f32 to vector<1x128xf32>
      %c0_19 = arith.constant 0 : index
      %c0_20 = arith.constant 0 : index
      %28 = vector.load %arg10[%c0_19, %c0_20] : memref<1x128xf32, #tpu.memory_space<vmem>>, vector<1x128xf32>
      tpu.vector_store %arg10[%c0_19, %c0_20], %27 {strides = array<i32>} : memref<1x128xf32, #tpu.memory_space<vmem>>, vector<1x128xf32>,
    } else {
    }
    %c128_i32 = arith.constant 128 : i32
    %8 = arith.muli %arg1, %c128_i32 : i32
    %9 = tpu.assume_multiple %8, 128 : i32
    %10 = arith.index_cast %9 : i32 to index
    %c0 = arith.constant 0 : index
    %11 = vector.load %arg3[%10, %c0] : memref<128x128xbf16, #tpu.memory_space<vmem>>, vector<128x128xbf16>
    %c0_4 = arith.constant 0 : index
    %c0_5 = arith.constant 0 : index
    %12 = vector.load %arg8[%c0_4, %c0_5] : memref<16x128xf32, #tpu.memory_space<vmem>>, vector<16x128xf32>
    %c0_6 = arith.constant 0 : index
    %c0_7 = arith.constant 0 : index
    %13 = vector.load %arg2[%c0_6, %c0_7] : memref<16x128xbf16, #tpu.memory_space<vmem>>, vector<16x128xbf16>
    %cst = arith.constant dense<0.000000e+00> : vector<16x128xf32>
    %14 = tpu.matmul %13, %11, %cst {dimension_numbers = #tpu.dot_dimension_numbers<[1], [0], [0], [1], [0, 0, 1, 1], [], []>} : vector<16x128xbf16>, vector<128x128xbf16>, vector<16x128xf32> -> vector<16x128xf32>
    %15 = arith.addf %12, %14 : vector<16x128xf32>
    %c0_8 = arith.constant 0 : index
    %c0_9 = arith.constant 0 : index
    %16 = vector.load %arg8[%c0_8, %c0_9] : memref<16x128xf32, #tpu.memory_space<vmem>>, vector<16x128xf32>
    tpu.vector_store %arg8[%c0_8, %c0_9], %15 {strides = array<i32>} : memref<16x128xf32, #tpu.memory_space<vmem>>, vector<16x128xf32>,
    %c0_i32_10 = arith.constant 0 : i32
    %17 = arith.cmpi eq, %arg1, %c0_i32_10 : i32
    %18 = arith.extui %17 : i1 to i32
    %c0_i32_11 = arith.constant 0 : i32
    %19 = arith.cmpi ne, %18, %c0_i32_11 : i32
    scf.if %19 {
      %c0_15 = arith.constant 0 : index
      %c0_16 = arith.constant 0 : index
      %25 = vector.load %arg8[%c0_15, %c0_16] : memref<16x128xf32, #tpu.memory_space<vmem>>, vector<16x128xf32>
      %c0_17 = arith.constant 0 : index
      %c0_18 = arith.constant 0 : index
      %26 = vector.load %arg4[%c0_17, %c0_18] : memref<1x128xf32, #tpu.memory_space<vmem>>, vector<1x128xf32>
      %27 = vector.broadcast %26 : vector<1x128xf32> to vector<16x128xf32>
      %28 = arith.addf %25, %27 : vector<16x128xf32>
      %cst_19 = arith.constant 0.000000e+00 : f32
      %29 = vector.broadcast %cst_19 : f32 to vector<16x128xf32>
      %30 = arith.cmpf ogt, %28, %29 : vector<16x128xf32>
      %cst_20 = arith.constant 0.00999999977 : f32
      %31 = vector.broadcast %cst_20 : f32 to vector<16x128xf32>
      %32 = arith.mulf %31, %28 : vector<16x128xf32>
      %33 = arith.select %30, %28, %32 : vector<16x128xi1>, vector<16x128xf32>
      %c16_i32 = arith.constant 16 : i32
      %34 = arith.muli %arg0, %c16_i32 : i32
      %35 = tpu.iota {dimensions = array<i32: 0>} : vector<16x1xi32>
      %36 = vector.broadcast %34 : i32 to vector<16x1xi32>
      %37 = arith.addi %36, %35 : vector<16x1xi32>
      %c16_i32_21 = arith.constant 16 : i32
      %38 = vector.broadcast %c16_i32_21 : i32 to vector<16x1xi32>
      %39 = arith.cmpi slt, %37, %38 : vector<16x1xi32>
      %40 = arith.extui %39 : vector<16x1xi1> to vector<16x1xi32>
      %41 = arith.sitofp %40 : vector<16x1xi32> to vector<16x1xf32>
      %42 = vector.broadcast %41 : vector<16x1xf32> to vector<16x128xf32>
      %43 = arith.mulf %33, %42 : vector<16x128xf32>
      %cst_22 = arith.constant dense<0.000000e+00> : vector<128xf32>
      %44 = vector.multi_reduction <add>, %43, %cst_22 [0] : vector<16x128xf32> to vector<128xf32>
      %45 = vector.shape_cast %44 : vector<128xf32> to vector<1x128xf32>
      %46 = arith.mulf %43, %43 : vector<16x128xf32>
      %cst_23 = arith.constant dense<0.000000e+00> : vector<128xf32>
      %47 = vector.multi_reduction <add>, %46, %cst_23 [0] : vector<16x128xf32> to vector<128xf32>
      %48 = vector.shape_cast %47 : vector<128xf32> to vector<1x128xf32>
      %c16_i32_24 = arith.constant 16 : i32
      %49 = arith.muli %arg0, %c16_i32_24 : i32
      %50 = tpu.assume_multiple %49, 16 : i32
      %51 = arith.index_cast %50 : i32 to index
      %c0_25 = arith.constant 0 : index
      %52 = vector.load %arg7[%51, %c0_25] : memref<16x128xf32, #tpu.memory_space<vmem>>, vector<16x128xf32>
      tpu.vector_store %arg7[%51, %c0_25], %33 {strides = array<i32>} : memref<16x128xf32, #tpu.memory_space<vmem>>, vector<16x128xf32>,
      %c0_26 = arith.constant 0 : index
      %c0_27 = arith.constant 0 : index
      %53 = vector.load %arg9[%c0_26, %c0_27] : memref<1x128xf32, #tpu.memory_space<vmem>>, vector<1x128xf32>
      %54 = arith.addf %53, %45 : vector<1x128xf32>
      %c0_28 = arith.constant 0 : index
      %c0_29 = arith.constant 0 : index
      %55 = vector.load %arg9[%c0_28, %c0_29] : memref<1x128xf32, #tpu.memory_space<vmem>>, vector<1x128xf32>
      tpu.vector_store %arg9[%c0_28, %c0_29], %54 {strides = array<i32>} : memref<1x128xf32, #tpu.memory_space<vmem>>, vector<1x128xf32>,
      %c0_30 = arith.constant 0 : index
      %c0_31 = arith.constant 0 : index
      %56 = vector.load %arg10[%c0_30, %c0_31] : memref<1x128xf32, #tpu.memory_space<vmem>>, vector<1x128xf32>
      %57 = arith.addf %56, %48 : vector<1x128xf32>
      %c0_32 = arith.constant 0 : index
      %c0_33 = arith.constant 0 : index
      %58 = vector.load %arg10[%c0_32, %c0_33] : memref<1x128xf32, #tpu.memory_space<vmem>>, vector<1x128xf32>
      tpu.vector_store %arg10[%c0_32, %c0_33], %57 {strides = array<i32>} : memref<1x128xf32, #tpu.memory_space<vmem>>, vector<1x128xf32>,
    } else {
    }
    %c0_i32_12 = arith.constant 0 : i32
    %20 = arith.cmpi eq, %arg0, %c0_i32_12 : i32
    %c0_i32_13 = arith.constant 0 : i32
    %21 = arith.cmpi eq, %arg1, %c0_i32_13 : i32
    %22 = arith.andi %20, %21 : i1
    %23 = arith.extui %22 : i1 to i32
    %c0_i32_14 = arith.constant 0 : i32
    %24 = arith.cmpi ne, %23, %c0_i32_14 : i32
    scf.if %24 {
      %c0_15 = arith.constant 0 : index
      %c0_16 = arith.constant 0 : index
      %25 = vector.load %arg9[%c0_15, %c0_16] : memref<1x128xf32, #tpu.memory_space<vmem>>, vector<1x128xf32>
      %cst_17 = arith.constant 6.250000e-02 : f32
      %26 = vector.broadcast %cst_17 : f32 to vector<1x128xf32>
      %27 = arith.mulf %25, %26 : vector<1x128xf32>
      %c0_18 = arith.constant 0 : index
      %c0_19 = arith.constant 0 : index
      %28 = vector.load %arg10[%c0_18, %c0_19] : memref<1x128xf32, #tpu.memory_space<vmem>>, vector<1x128xf32>
      %cst_20 = arith.constant 6.250000e-02 : f32
      %29 = vector.broadcast %cst_20 : f32 to vector<1x128xf32>
      %30 = arith.mulf %28, %29 : vector<1x128xf32>
      %31 = arith.mulf %27, %27 : vector<1x128xf32>
      %32 = arith.subf %30, %31 : vector<1x128xf32>
      %cst_21 = arith.constant 0.000000e+00 : f32
      %33 = vector.broadcast %cst_21 : f32 to vector<1x128xf32>
      %34 = arith.maximumf %32, %33 : vector<1x128xf32>
      %cst_22 = arith.constant 9.99999974E-6 : f32
      %35 = vector.broadcast %cst_22 : f32 to vector<1x128xf32>
      %36 = arith.addf %34, %35 : vector<1x128xf32>
      %37 = math.rsqrt %36 : vector<1x128xf32>
      %c0_23 = arith.constant 0 : index
      %c0_24 = arith.constant 0 : index
      %38 = vector.load %arg5[%c0_23, %c0_24] : memref<1x128xf32, #tpu.memory_space<vmem>>, vector<1x128xf32>
      %39 = arith.mulf %38, %37 : vector<1x128xf32>
      %c0_25 = arith.constant 0 : index
      %c0_26 = arith.constant 0 : index
      %40 = vector.load %arg6[%c0_25, %c0_26] : memref<1x128xf32, #tpu.memory_space<vmem>>, vector<1x128xf32>
      %41 = arith.mulf %27, %39 : vector<1x128xf32>
      %42 = arith.subf %40, %41 : vector<1x128xf32>
      %c0_27 = arith.constant 0 : index
      %c0_28 = arith.constant 0 : index
      %43 = vector.load %arg7[%c0_27, %c0_28] : memref<16x128xf32, #tpu.memory_space<vmem>>, vector<16x128xf32>
      %44 = vector.broadcast %39 : vector<1x128xf32> to vector<16x128xf32>
      %45 = arith.mulf %43, %44 : vector<16x128xf32>
      %46 = vector.broadcast %42 : vector<1x128xf32> to vector<16x128xf32>
      %47 = arith.addf %45, %46 : vector<16x128xf32>
      %c0_29 = arith.constant 0 : index
      %c0_30 = arith.constant 0 : index
      %48 = vector.load %arg7[%c0_29, %c0_30] : memref<16x128xf32, #tpu.memory_space<vmem>>, vector<16x128xf32>
      tpu.vector_store %arg7[%c0_29, %c0_30], %47 {strides = array<i32>} : memref<16x128xf32, #tpu.memory_space<vmem>>, vector<16x128xf32>,
    } else {
    }
    return
  }
  func.func @transform_0(%arg0: i32, %arg1: i32) -> (i32, i32) {
    %c0_i32 = arith.constant 0 : i32
    return %arg0, %arg1 : i32, i32
  }
  func.func @transform_1(%arg0: i32, %arg1: i32) -> (i32, i32) {
    %c0_i32 = arith.constant 0 : i32
    %c0_i32_0 = arith.constant 0 : i32
    %c0_i32_1 = arith.constant 0 : i32
    return %c0_i32, %c0_i32_0 : i32, i32
  }
  func.func @transform_2(%arg0: i32, %arg1: i32) -> (i32, i32) {
    %c0_i32 = arith.constant 0 : i32
    %c0_i32_0 = arith.constant 0 : i32
    %c0_i32_1 = arith.constant 0 : i32
    return %c0_i32, %c0_i32_0 : i32, i32
  }
  func.func @transform_3(%arg0: i32, %arg1: i32) -> (i32, i32) {
    %c0_i32 = arith.constant 0 : i32
    %c0_i32_0 = arith.constant 0 : i32
    %c0_i32_1 = arith.constant 0 : i32
    return %c0_i32, %c0_i32_0 : i32, i32
  }
  func.func @transform_4(%arg0: i32, %arg1: i32) -> (i32, i32) {
    %c0_i32 = arith.constant 0 : i32
    %c0_i32_0 = arith.constant 0 : i32
    %c0_i32_1 = arith.constant 0 : i32
    return %c0_i32, %c0_i32_0 : i32, i32
  }
  func.func @transform_5(%arg0: i32, %arg1: i32) -> (i32, i32) {
    %c0_i32 = arith.constant 0 : i32
    %c0_i32_0 = arith.constant 0 : i32
    %c0_i32_1 = arith.constant 0 : i32
    return %c0_i32, %c0_i32_0 : i32, i32
  }
}

</mosaic_0001>

<llo_original>
// kernel: bd_layer.1
$region0: #{bd_layer.1}
  #allocation0 [shape = 'u32[]', space=smem, size = 0x4, offset = 0x4, fixed_abs, tag = 'smem constant byte address 0x4 - core index']
  #allocation1 [shape = 'u32[72,128]{1,0:T(1,128)}', space=vmem, size = 0x9000, scoped, tag = 'internal scratch']
  #allocation2 [shape = 'f32[16,128]{1,0:T(8,128)}', space=vmem, size = 0x2000, scoped, tag = 'scratch operand']
  #allocation3 [shape = 'f32[1,128]{1,0:T(1,128)}', space=vmem, size = 0x200, scoped, tag = 'scratch operand']
  #allocation4 [shape = 'f32[1,128]{1,0:T(1,128)}', space=vmem, size = 0x200, scoped, tag = 'scratch operand']
  %s0 = inlined_call_operand.vmem [shape: bf16[16,128], index: 0, kind: input, shape index: {}]
  %s1 = inlined_call_operand.vmem [shape: bf16[128,128], index: 1, kind: input, shape index: {}]
  %s2 = inlined_call_operand.vmem [shape: f32[1,128], index: 2, kind: input, shape index: {}]
  %s3 = inlined_call_operand.vmem [shape: f32[1,128], index: 3, kind: input, shape index: {}]
  %s4 = inlined_call_operand.vmem [shape: f32[1,128], index: 4, kind: input, shape index: {}]
  %s5 = inlined_call_operand.hbm [shape: f32[16,128], index: 5, kind: output, shape index: {}]
  %s6 = sld [smem:[#allocation0]]
  $region46: #{bd_layer.1} parent=0
    _
  %s8 = ssub.s32 1, %s6
  %s9 = scalar_select 0, %s8, %s6
  $region1: #{bd_layer.1} parent=0
    #allocation5 [shape = 'u8[8192]{0}', space=vmem, size = 0x2000, scoped, tag = 'output window, operand 0, single buffered']
    #allocation6 [shape = 's32[1]{0}', space=sflag, size = 0x4, scoped, tag = 'scoped memory for bd_layer.1']
    %10 = vsyncpa [#allocation6], 0
    // Predicated region
    $region2: #{bd_layer.1} parent=1 // pred_check
      _
    $region3: #{bd_layer.1} parent=1 // pred_check_branch
      %12 = sbr.rel (0) target = $region5
    $region4: #{bd_layer.1} parent=1 // pred_region
      _
    $region5: #{bd_layer.1} parent=1 // pred_fallthru
      _
    // Predicated region
    $region6: #{bd_layer.1} parent=1 // pred_check
      _
    $region7: #{bd_layer.1} parent=1 // pred_check_branch
      %14 = sbr.rel (0) target = $region9
    $region8: #{bd_layer.1} parent=1 // pred_region
      _
    $region9: #{bd_layer.1} parent=1 // pred_fallthru
      _
    // Predicated region
    $region10: #{bd_layer.1} parent=1 // pred_check
      _
    $region11: #{bd_layer.1} parent=1 // pred_check_branch
      %16 = sbr.rel (0) target = $region13
    $region12: #{bd_layer.1} parent=1 // pred_region
      _
    $region13: #{bd_layer.1} parent=1 // pred_fallthru
      _
    // Predicated region
    $region14: #{bd_layer.1} parent=1 // pred_check
      _
    $region15: #{bd_layer.1} parent=1 // pred_check_branch
      %18 = sbr.rel (0) target = $region17
    $region16: #{bd_layer.1} parent=1 // pred_region
      _
    $region17: #{bd_layer.1} parent=1 // pred_fallthru
      _
    // Predicated region
    $region18: #{bd_layer.1} parent=1 // pred_check
      _
    $region19: #{bd_layer.1} parent=1 // pred_check_branch
      %20 = sbr.rel (0) target = $region21
    $region20: #{bd_layer.1} parent=1 // pred_region
      _
    $region21: #{bd_layer.1} parent=1 // pred_fallthru
      _
    %p21 = scmp.eq.s32.totalorder 0, 0
    // Predicated region
    $region22: #{bd_layer.1} parent=1 // pred_check
      %p22 = pneg %p21
    $region23: #{bd_layer.1} parent=1 // pred_check_branch
      %24 = sbr.rel (%p22) target = $region25
    $region24: #{bd_layer.1} parent=1 // pred_region
      %25 = vst [vmem:[#allocation2] sm:$0xff] 0.0
      %26 = vst [vmem:[#allocation2 + $0x8] sm:$0xff] 0.0
    $region25: #{bd_layer.1} parent=1 // pred_fallthru
      _
    %p27 = scmp.eq.s32.totalorder 0, 0
    %p28 = pnand %p27, %p21
    %p29 = pneg %p28
    // Predicated region
    $region26: #{bd_layer.1} parent=1 // pred_check
      _
    $region27: #{bd_layer.1} parent=1 // pred_check_branch
      %31 = sbr.rel (%p28) target = $region29
    $region28: #{bd_layer.1} parent=1 // pred_region
      %32 = vst [vmem:[#allocation3] sm:$0x1] 0.0
      %33 = vst [vmem:[#allocation4] sm:$0x1] 0.0
    $region29: #{bd_layer.1} parent=1 // pred_fallthru
      _
    %s34 = smul.u32 0, 128
    %s35 = sshra.s32 %s34, 3
    %s36 = sand.u32 %s34, 7
    %s37 = smul.addr %s35, 4
    %s38 = scalar_lea.vmem %s1, %s37
    %v39 = vld [vmem:[%s38] sm:$0xf]
    %v40 = vld [vmem:[%s38 + $0x4] sm:$0xf]
    %v41 = vld [vmem:[%s38 + $0x8] sm:$0xf]
    %v42 = vld [vmem:[%s38 + $0xc] sm:$0xf]
    %v43 = vld [vmem:[%s38 + $0x10] sm:$0xf]
    %v44 = vld [vmem:[%s38 + $0x14] sm:$0xf]
    %v45 = vld [vmem:[%s38 + $0x18] sm:$0xf]
    %v46 = vld [vmem:[%s38 + $0x1c] sm:$0xf]
    %v47 = vld [vmem:[%s38 + $0x20] sm:$0xf]
    %v48 = vld [vmem:[%s38 + $0x24] sm:$0xf]
    %v49 = vld [vmem:[%s38 + $0x28] sm:$0xf]
    %v50 = vld [vmem:[%s38 + $0x2c] sm:$0xf]
    %v51 = vld [vmem:[%s38 + $0x30] sm:$0xf]
    %v52 = vld [vmem:[%s38 + $0x34] sm:$0xf]
    %v53 = vld [vmem:[%s38 + $0x38] sm:$0xf]
    %v54 = vld [vmem:[%s38 + $0x3c] sm:$0xf]
    %v55 = vld [vmem:[#allocation2] sm:$0xff]
    %v56 = vld [vmem:[#allocation2 + $0x8] sm:$0xff]
    %v57 = vld [vmem:[%s0] sm:$0xf]
    %v58 = vld [vmem:[%s0 + $0x4] sm:$0xf]
    %v61 = vunpack.c.l.b16 %v57
    %v62 = vunpack.c.l.b16 %v58
    %v63 = vpack.c.b16 %v62, %v61
    %v81 = vunpack.c.l.b16 %v39
    %v82 = vunpack.c.l.b16 %v40
    %v83 = vunpack.c.l.b16 %v41
    %v84 = vunpack.c.l.b16 %v42
    %v85 = vunpack.c.l.b16 %v43
    %v86 = vunpack.c.l.b16 %v44
    %v87 = vunpack.c.l.b16 %v45
    %v88 = vunpack.c.l.b16 %v46
    %v89 = vunpack.c.l.b16 %v47
    %v90 = vunpack.c.l.b16 %v48
    %v91 = vunpack.c.l.b16 %v49
    %v92 = vunpack.c.l.b16 %v50
    %v93 = vunpack.c.l.b16 %v51
    %v94 = vunpack.c.l.b16 %v52
    %v95 = vunpack.c.l.b16 %v53
    %v96 = vunpack.c.l.b16 %v54
    %v97 = vpack.c.b16 %v82, %v81
    %v98 = vpack.c.b16 %v84, %v83
    %v99 = vpack.c.b16 %v86, %v85
    %v100 = vpack.c.b16 %v88, %v87
    %v101 = vpack.c.b16 %v90, %v89
    %v102 = vpack.c.b16 %v92, %v91
    %v103 = vpack.c.b16 %v94, %v93
    %v104 = vpack.c.b16 %v96, %v95
    %113 = vmatpush.bf16.msra.mxu0 %v104
    %114 = vmatpush.bf16.msra.mxu0 %v103
    %115 = vmatpush.bf16.msra.mxu0 %v102
    %116 = vmatpush.bf16.msra.mxu0 %v101
    %117 = vmatpush.bf16.msra.mxu0 %v100
    %118 = vmatpush.bf16.msra.mxu0 %v99
    %119 = vmatpush.bf16.msra.mxu0 %v98
    %120 = vmatpush.bf16.msra.mxu0 %v97
    %121 = vmatmul.bf16.gmra.mxu0 %v63
    %v122 = vpop.f32.mrf.mxu0
    %v123 = vadd.f32 0.0, %v122
    %v124 = vpop.f32.mrf.mxu0
    %v125 = vadd.f32 0.0, %v124
    %126 = vdwg.mxu0
    %v127 = vadd.f32 %v55, %v123
    %v128 = vadd.f32 %v56, %v125
    %129 = vst [vmem:[#allocation2] sm:$0xff] %v127
    %130 = vst [vmem:[#allocation2 + $0x8] sm:$0xff] %v128
    // Predicated region
    $region30: #{bd_layer.1} parent=1 // pred_check
      %p131 = pneg %p21
    $region31: #{bd_layer.1} parent=1 // pred_check_branch
      %133 = sbr.rel (%p131) target = $region33
    $region32: #{bd_layer.1} parent=1 // pred_region
      %v134 = vld [vmem:[#allocation2] sm:$0xff]
      %v135 = vld [vmem:[#allocation2 + $0x8] sm:$0xff]
      %v136 = vld [vmem:[%s2] sm:$0x1]
      %v138 = vperm.slane %v136, 0
      %v140 = vadd.f32 %v134, %v138
      %v141 = vadd.f32 %v135, %v138
      %vm142 = vcmp.gt.f32.partialorder %v140, 0.0
      %vm143 = vcmp.gt.f32.partialorder %v141, 0.0
      %v144 = vmul.f32 %v140, 0.01
      %v145 = vmul.f32 %v141, 0.01
      %v146 = vsel %vm142, %v140, %v144
      %v147 = vsel %vm143, %v141, %v145
      %s148 = smul.u32 0, 16
      %v149 = vlaneseq
      %v150 = vshrl.u32 %v149, 7
      %v151 = vadd.s32 %v150, 8
      %v152 = vstv %s148
      %v153 = vadd.s32 %v152, %v150
      %v154 = vadd.s32 %v152, %v151
      %vm155 = vcmp.lt.s32.totalorder %v153, 16
      %vm156 = vcmp.lt.s32.totalorder %v154, 16
      %v157 = vsel %vm155, 1, 0
      %v158 = vsel %vm156, 1, 0
      %v159 = vcvt.s32.f32 %v157
      %v160 = vcvt.s32.f32 %v158
      %v161 = vmul.f32 %v146, %v159
      %v162 = vmul.f32 %v147, %v160
      %v163 = vadd.f32 %v161, %v162
      %v164 = vrot.slane %v163, 4
      %v165 = vadd.f32 %v163, %v164
      %v166 = vrot.slane %v165, 2
      %v167 = vadd.f32 %v165, %v166
      %v168 = vrot.slane %v167, 1
      %v169 = vadd.f32 %v167, %v168
      %v170 = vmul.f32 %v161, %v161
      %v171 = vmul.f32 %v162, %v162
      %v172 = vadd.f32 %v170, %v171
      %v173 = vrot.slane %v172, 4
      %v174 = vadd.f32 %v172, %v173
      %v175 = vrot.slane %v174, 2
      %v176 = vadd.f32 %v174, %v175
      %v177 = vrot.slane %v176, 1
      %v178 = vadd.f32 %v176, %v177
      %s179 = scalar_lea.vmem [#allocation5], %s148
      %180 = vst [vmem:[%s179] sm:$0xff] %v146
      %181 = vst [vmem:[%s179 + $0x8] sm:$0xff] %v147
      %v182 = vld [vmem:[#allocation3] sm:$0x1]
      %v183 = vadd.f32 %v182, %v169
      %184 = vst [vmem:[#allocation3] sm:$0x1] %v183
      %v185 = vld [vmem:[#allocation4] sm:$0x1]
      %v186 = vadd.f32 %v185, %v178
      %187 = vst [vmem:[#allocation4] sm:$0x1] %v186
    $region33: #{bd_layer.1} parent=1 // pred_fallthru
      _
    // Predicated region
    $region34: #{bd_layer.1} parent=1 // pred_check
      _
    $region35: #{bd_layer.1} parent=1 // pred_check_branch
      %189 = sbr.rel (%p28) target = $region37
    $region36: #{bd_layer.1} parent=1 // pred_region
      %v190 = vld [vmem:[#allocation3] sm:$0x1]
      %v191 = vmul.f32 %v190, 0.0625
      %v192 = vld [vmem:[#allocation4] sm:$0x1]
      %v193 = vmul.f32 %v192, 0.0625
      %v194 = vmul.f32 %v191, %v191
      %v195 = vsub.f32 %v193, %v194
      %v196 = vmax.f32 %v195, 0.0
      %v197 = vadd.f32 %v196, 1e-05
      %v198 = vrsqrt.pop %v197
      %v199 = vmul.f32 %v198, %v197
      %v200 = vmul.f32 %v199, %v198
      %v201 = vmul.f32 0.5, %v200
      %v202 = vsub.f32 1.5, %v201
      %v203 = vmul.f32 %v198, %v202
      %vm204 = vweird.f32 %v197
      %vm205 = vweird.f32 %v198
      %vm206 = vmor %vm204, %vm205
      %v207 = vsel %vm206, %v198, %v203
      %v208 = vld [vmem:[%s3] sm:$0x1]
      %v209 = vmul.f32 %v208, %v207
      %v210 = vld [vmem:[%s4] sm:$0x1]
      %v211 = vmul.f32 %v191, %v209
      %v212 = vsub.f32 %v210, %v211
      %v213 = vld [vmem:[#allocation5] sm:$0xff]
      %v214 = vld [vmem:[#allocation5 + $0x8] sm:$0xff]
      %v216 = vperm.slane %v209, 0
      %v218 = vmul.f32 %v213, %v216
      %v219 = vmul.f32 %v214, %v216
      %v221 = vperm.slane %v212, 0
      %v223 = vadd.f32 %v218, %v221
      %v224 = vadd.f32 %v219, %v221
      %225 = vst [vmem:[#allocation5] sm:$0xff] %v223
      %226 = vst [vmem:[#allocation5 + $0x8] sm:$0xff] %v224
    $region37: #{bd_layer.1} parent=1 // pred_fallthru
      _
    // Predicated region
    $region38: #{bd_layer.1} parent=1 // pred_check
      _
    $region39: #{bd_layer.1} parent=1 // pred_check_branch
      %228 = sbr.rel (0) target = $region41
    $region40: #{bd_layer.1} parent=1 // pred_region
      %230 = vsyncadd [#allocation6], 0
      %s231 = sshll.u32 [#allocation5], 4
      %s232 = int_to_ptr.vmem [resolvable:$true] %s231
      %s233 = sshll.u32 %s5, 4
      %s234 = int_to_ptr.hbm [resolvable:$true] %s233
      %239 = dma.vmem_to_hbm [thread:$0]  %s232, 256, %s234, [#allocation6], 128, 128, 8
    $region41: #{bd_layer.1} parent=1 // pred_fallthru
      _
    // Predicated region
    $region42: #{bd_layer.1} parent=1 // pred_check
      _
    $region43: #{bd_layer.1} parent=1 // pred_check_branch
      %241 = sbr.rel (0) target = $region45
    $region44: #{bd_layer.1} parent=1 // pred_region
      %243 = dma.done [#allocation6], 256
    $region45: #{bd_layer.1} parent=1 // pred_fallthru
      _
    %244 = vsyncpa [#allocation6], 1

</llo_original>
